<compile_context>
chip_gen: v5e
topology: v5e:2x2
jax: 0.10.0
libtpu: 0.0.40
codegen_flags: <defaults>
</compile_context>

<pallas_src>
import jax
import jax.numpy as jnp
from jax import lax
from jax.experimental import pallas as pl
from jax.experimental.pallas import tpu as pltpu


def _round_up(x, m):
    return (x + m - 1) // m * m


def _cdiv(a, b):
    return (a + b - 1) // b


def _sublane(dtype):
    # Sublane packing granularity: f32 -> 8, bf16 -> 16, int8/fp8 -> 32.
    return max(8, 32 // jnp.dtype(dtype).itemsize)


def _vmem_budget_bytes():
    # Per-generation budget: ~48 MiB on v7x (64 MiB/TC), ~96 MiB on v5e/v6e
    # (128 MiB). Fall back to the smallest generation if the query fails.
    try:
        cap = int(pltpu.get_tpu_info().vmem_capacity_bytes)
    except Exception:
        cap = 64 << 20
    return (cap * 3) // 4


def _make_lr_kernel(tk, k_rem):
    def kernel(x_ref, w_ref, o_ref, acc_ref):
        k = pl.program_id(2)
        nk = pl.num_programs(2)

        @pl.when(k == 0)
        def _init():
            acc_ref[...] = jnp.zeros_like(acc_ref)

        x = x_ref[...]
        if k_rem:
            # Final (ragged) K block: zero the out-of-range feature columns so
            # garbage past K never reaches the accumulator. The matching
            # weight rows are genuine zeros (padded once in the wrapper).
            col = lax.broadcasted_iota(jnp.int32, x.shape, 1)
            limit = jnp.where(k == nk - 1, k_rem, tk)
            x = jnp.where(col < limit, x, jnp.zeros_like(x))

        # Weight is already (K, N): straight MXU contraction, f32 accumulate.
        acc_ref[...] += jnp.dot(x, w_ref[...],
                                preferred_element_type=jnp.float32)

        @pl.when(k == nk - 1)
        def _finalize():
            o_ref[...] = acc_ref[...].astype(o_ref.dtype)

    return kernel


def lr_forward(x, weight, *, tm=None, tk=None, tn=None):
    """LR.forward: x.view(-1, input_dim) @ weight.T (nn.Linear, bias=False).

    x:      any shape whose trailing dims flatten to input_dim per row.
    weight: (nb_classes, input_dim) -- nn.Linear convention.
    tm/tk/tn: optional tile overrides (batch rows / features / classes).
    """
    nb_classes, input_dim = weight.shape
    x2d = x.reshape(-1, input_dim)          # same as torch .view(-1, input_dim)
    M, K = x2d.shape
    N = nb_classes

    x_iz = jnp.dtype(x2d.dtype).itemsize
    o_iz = x_iz
    sub = _sublane(x2d.dtype)
    budget = _vmem_budget_bytes()
    auto_m, auto_k, auto_n = tm is None, tk is None, tn is None

    # ---- tile sizing -------------------------------------------------------
    # M tile: ~4 MiB of x per grid step (amortizes ~0.35us/step), clamped to
    # the sublane-rounded batch; keep >=2 row tiles so v7x's two TensorCores
    # both get work on the "parallel" M axis (harmless on v5e/v6e).
    m_ceil = _round_up(M, sub)
    if auto_m:
        tm = max(256, min(2048, (4 << 20) // max(1, K * x_iz)))
    tm = min(_round_up(tm, sub), m_ceil)
    if _cdiv(M, tm) < 2 and M > sub:
        tm = _round_up(_cdiv(M, 2), sub)

    # N tile: lane-dense multiple of 128, covering all classes when possible.
    n_ceil = _round_up(N, 128)
    tn = n_ceil if auto_n else min(max(128, _round_up(tn, 128)), n_ceil)

    # K tile: full K when it fits (no reduction grid axis); else 128-multiple.
    if auto_k or tk >= K:
        tk = K
    else:
        tk = min(max(128, _round_up(tk, 128)), _round_up(K, 128))

    def _vmem_need(tm_, tk_, tn_):
        nk_ = _cdiv(K, tk_)
        nj_ = _cdiv(N, tn_)
        w_bufs = 1 if (nk_ == 1 and nj_ == 1) else 2
        return (2 * tm_ * tk_ * x_iz          # x tile (double-buffered)
                + w_bufs * tk_ * tn_ * x_iz   # weight tile
                + 2 * tm_ * tn_ * o_iz        # output tile (double-buffered)
                + tm_ * tn_ * 4)              # f32 accumulator scratch

    # Shrink tiles until the working set fits this generation's VMEM budget.
    while _vmem_need(tm, tk, tn) > budget:
        can_k = auto_k and tk > 128 and K > 128
        can_n = auto_n and tn > 128
        can_m = auto_m and tm > sub
        if can_k and (tk >= tn or not can_n):
            tk = max(128, _round_up(tk // 2, 128))
        elif can_n:
            tn = max(128, _round_up(tn // 2, 128))
        elif can_m:
            tm = max(sub, _round_up(tm // 2, sub))
        else:
            break  # smallest legal tiles; raise the limit and let Mosaic try

    mi = _cdiv(M, tm)
    nj = _cdiv(N, tn)
    nk = _cdiv(K, tk)
    k_pad = nk * tk
    k_rem = K % tk if nk > 1 else 0

    # One-time transpose of the (small) weight to (K, N); zero-pad the
    # contracted axis only when K is tiled with a ragged tail.
    w_t = weight.T
    if k_pad != K:
        w_t = jnp.pad(w_t, ((0, k_pad - K), (0, 0)))

    x_spec = pl.BlockSpec((tm, tk), lambda i, j, k: (i, k))
    if nj == 1 and nk == 1:
        # Grid-invariant weight: fetched once, single-buffered (halves VMEM).
        w_spec = pl.BlockSpec((tk, tn), lambda i, j, k: (k, j),
                              pipeline_mode=pl.Buffered(1))
    else:
        w_spec = pl.BlockSpec((tk, tn), lambda i, j, k: (k, j))
    o_spec = pl.BlockSpec((tm, tn), lambda i, j, k: (i, j))

    need = _vmem_need(tm, tk, tn)
    vmem_limit = int(max(need + need // 4 + (2 << 20), 32 << 20))
    vmem_limit = int(min(vmem_limit, max(budget, need + (2 << 20))))

    w_reads = 1 if (nj == 1 and nk == 1) else mi
    cost = pl.CostEstimate(
        flops=2 * M * K * N,
        transcendentals=0,
        bytes_accessed=(nj * M * K + w_reads * K * N + M * N) * x_iz,
    )

    return pl.pallas_call(
        _make_lr_kernel(tk, k_rem),
        out_shape=jax.ShapeDtypeStruct((M, N), x2d.dtype),
        grid_spec=pltpu.PrefetchScalarGridSpec(
            num_scalar_prefetch=0,
            grid=(mi, nj, nk),
            in_specs=[x_spec, w_spec],
            out_specs=o_spec,
            scratch_shapes=[pltpu.VMEM((tm, tn), jnp.float32)],
        ),
        compiler_params=pltpu.CompilerParams(
            dimension_semantics=("parallel", "parallel", "arbitrary"),
            vmem_limit_bytes=vmem_limit,
        ),
        cost_estimate=cost,
    )(x2d, w_t)


if __name__ == "__main__":
    key = jax.random.PRNGKey(0)
    k1, k2, k3, k4 = jax.random.split(key, 4)

    # --- test 1: tiny demo (fast path: full-K weight, single-buffered) ------
    input_dim, nb_classes = 32, 10
    x = jax.random.normal(k1, (2, 5, input_dim), jnp.float32)
    w = jax.random.normal(k2, (nb_classes, input_dim), jnp.float32) * 0.1
    out = lr_forward(x, w)
    jax.block_until_ready(out)
    ref = x.reshape(-1, input_dim) @ w.T
    assert out.shape == (10, nb_classes), out.shape
    assert jnp.allclose(out, ref, atol=1e-4, rtol=1e-4)

    # --- test 2: forced small tiles -> exercises N/K tiling + ragged K mask -
    input_dim2, nb_classes2 = 200, 300
    x2 = jax.random.normal(k3, (3, 8, input_dim2), jnp.float32)
    w2 = jax.random.normal(k4, (nb_classes2, input_dim2), jnp.float32) * 0.05
    out2 = lr_forward(x2, w2, tm=8, tk=128, tn=128)
    jax.block_until_ready(out2)
    ref2 = x2.reshape(-1, input_dim2) @ w2.T
    assert out2.shape == (24, nb_classes2), out2.shape
    assert jnp.allclose(out2, ref2, atol=5e-3, rtol=5e-3)

    print("KERNEL_OK")
</pallas_src>

<mosaic_0001>
module attributes {stable_mosaic.version = 11 : i64} {
  func.func @kernel(%arg0: i32, %arg1: i32, %arg2: i32, %arg3: memref<8x32xf32, #tpu.memory_space<vmem>>, %arg4: memref<32x128xf32, #tpu.memory_space<vmem>>, %arg5: memref<8x128xf32, #tpu.memory_space<vmem>>, %arg6: memref<8x128xf32, #tpu.memory_space<vmem>>) attributes {dimension_semantics = [#tpu.dimension_semantics<parallel>, #tpu.dimension_semantics<parallel>, #tpu.dimension_semantics<arbitrary>], iteration_bounds = array<i64: 2, 1, 1>, scalar_prefetch = 0 : i64, scratch_operands = 1 : i64, tpu.core_type = #tpu.core_type<tc>, window_params = [{transform_indices = @transform_0, window_bounds = array<i64: 8, 32>}, {pipeline_mode = #tpu.pipeline_mode<synchronous>, transform_indices = @transform_1, window_bounds = array<i64: 32, 128>}, {transform_indices = @transform_2, window_bounds = array<i64: 8, 128>}]} {
    %c0_i32 = arith.constant 0 : i32
    %0 = arith.cmpi eq, %arg2, %c0_i32 : i32
    %1 = arith.extui %0 : i1 to i32
    %c0_i32_0 = arith.constant 0 : i32
    %2 = arith.cmpi ne, %1, %c0_i32_0 : i32
    scf.if %2 {
      %cst_10 = arith.constant 0.000000e+00 : f32
      %12 = vector.broadcast %cst_10 : f32 to vector<8x128xf32>
      %c0_11 = arith.constant 0 : index
      %c0_12 = arith.constant 0 : index
      %13 = vector.load %arg6[%c0_11, %c0_12] : memref<8x128xf32, #tpu.memory_space<vmem>>, vector<8x128xf32>
      tpu.vector_store %arg6[%c0_11, %c0_12], %12 {strides = array<i32>} : memref<8x128xf32, #tpu.memory_space<vmem>>, vector<8x128xf32>,
    } else {
    }
    %c0 = arith.constant 0 : index
    %c0_1 = arith.constant 0 : index
    %3 = vector.load %arg3[%c0, %c0_1] : memref<8x32xf32, #tpu.memory_space<vmem>>, vector<8x32xf32>
    %c0_2 = arith.constant 0 : index
    %c0_3 = arith.constant 0 : index
    %4 = vector.load %arg6[%c0_2, %c0_3] : memref<8x128xf32, #tpu.memory_space<vmem>>, vector<8x128xf32>
    %c0_4 = arith.constant 0 : index
    %c0_5 = arith.constant 0 : index
    %5 = vector.load %arg4[%c0_4, %c0_5] : memref<32x128xf32, #tpu.memory_space<vmem>>, vector<32x128xf32>
    %cst = arith.constant dense<0.000000e+00> : vector<8x128xf32>
    %6 = tpu.matmul %3, %5, %cst {dimension_numbers = #tpu.dot_dimension_numbers<[1], [0], [0], [1], [0, 0, 1, 1], [], []>} : vector<8x32xf32>, vector<32x128xf32>, vector<8x128xf32> -> vector<8x128xf32>
    %7 = arith.addf %4, %6 : vector<8x128xf32>
    %c0_6 = arith.constant 0 : index
    %c0_7 = arith.constant 0 : index
    %8 = vector.load %arg6[%c0_6, %c0_7] : memref<8x128xf32, #tpu.memory_space<vmem>>, vector<8x128xf32>
    tpu.vector_store %arg6[%c0_6, %c0_7], %7 {strides = array<i32>} : memref<8x128xf32, #tpu.memory_space<vmem>>, vector<8x128xf32>,
    %c0_i32_8 = arith.constant 0 : i32
    %9 = arith.cmpi eq, %arg2, %c0_i32_8 : i32
    %10 = arith.extui %9 : i1 to i32
    %c0_i32_9 = arith.constant 0 : i32
    %11 = arith.cmpi ne, %10, %c0_i32_9 : i32
    scf.if %11 {
      %c0_10 = arith.constant 0 : index
      %c0_11 = arith.constant 0 : index
      %12 = vector.load %arg6[%c0_10, %c0_11] : memref<8x128xf32, #tpu.memory_space<vmem>>, vector<8x128xf32>
      %c0_12 = arith.constant 0 : index
      %c0_13 = arith.constant 0 : index
      %13 = vector.load %arg5[%c0_12, %c0_13] : memref<8x128xf32, #tpu.memory_space<vmem>>, vector<8x128xf32>
      tpu.vector_store %arg5[%c0_12, %c0_13], %12 {strides = array<i32>} : memref<8x128xf32, #tpu.memory_space<vmem>>, vector<8x128xf32>,
    } else {
    }
    return
  }
  func.func @transform_0(%arg0: i32, %arg1: i32, %arg2: i32) -> (i32, i32) {
    %c0_i32 = arith.constant 0 : i32
    return %arg0, %arg2 : i32, i32
  }
  func.func @transform_1(%arg0: i32, %arg1: i32, %arg2: i32) -> (i32, i32) {
    %c0_i32 = arith.constant 0 : i32
    return %arg2, %arg1 : i32, i32
  }
  func.func @transform_2(%arg0: i32, %arg1: i32, %arg2: i32) -> (i32, i32) {
    %c0_i32 = arith.constant 0 : i32
    return %arg0, %arg1 : i32, i32
  }
}

</mosaic_0001>

<llo_original>
// kernel: tpu_custom_call.1
$region0: #{tpu_custom_call.1}
  #allocation0 [shape = 'u32[]', space=smem, size = 0x4, offset = 0x4, fixed_abs, tag = 'smem constant byte address 0x4 - core index']
  #allocation1 [shape = 'u32[72,128]{1,0:T(1,128)}', space=vmem, size = 0x9000, scoped, tag = 'internal scratch']
  #allocation2 [shape = 'f32[8,128]{1,0:T(8,128)}', space=vmem, size = 0x1000, scoped, tag = 'scratch operand']
  %s0 = inlined_call_operand.vmem [shape: f32[10,32], index: 0, kind: input, shape index: {}]
  %s1 = inlined_call_operand.vmem [shape: f32[32,10], index: 1, kind: input, shape index: {}]
  %s2 = inlined_call_operand.hbm [shape: f32[10,10], index: 2, kind: output, shape index: {}]
  %s3 = sld [smem:[#allocation0]]
  $region49: #{tpu_custom_call.1} parent=0
    _
  %s5 = ssub.s32 1, %s3
  %s6 = scalar_select 0, %s5, %s3
  $region1: #{tpu_custom_call.1} parent=0
    #allocation3 [shape = 'u8[8192]{0}', space=vmem, size = 0x2000, scoped, tag = 'output window, operand 0']
    #allocation4 [shape = 's32[2]{0}', space=sflag, size = 0x8, scoped, tag = 'scoped memory for tpu_custom_call.1']
    %7 = vsyncpa [#allocation4], 0
    %s8 = scalar_lea.sflag [#allocation4], 1
    %9 = vsyncpa %s8, 0
    loop: start=0, step=1, limit=4
    $region2: #{tpu_custom_call.1} parent=1 // loop_pre_header
      _
    $region3: #{tpu_custom_call.1} parent=1 // loop_header
      %s11 = sphi 0, %s15
      %p12 = scmp.ge.s32.totalorder %s11, 4
      %s18 = sphi 0, %s37
      %s19 = sphi 0, %s33
      %s20 = sphi 0, %s29
      %s21 = sphi 0, %s18
      %s22 = sphi 0, %s19
      %s23 = sphi 0, %s20
      %s24 = sphi 0, %s21
      %s25 = sphi 0, %s22
      %s26 = sphi 0, %s23
      %s42 = sphi 0, %s44
      %s45 = sphi 0, %s42
      %s46 = sphi 0, %s45
      %s62 = sphi 0, %s46
      %s70 = sphi 0, %s72
      %s73 = sphi 0, %s70
      %s74 = sphi 0, %s73
      %s90 = sphi 0, %s74
      %s98 = sphi 0, %s100
      %s101 = sphi 0, %s98
      %s102 = sphi 0, %s101
      %s118 = sphi 0, %s102
    $region4: #{tpu_custom_call.1} parent=1 // loop_header_branch
      %14 = sbr.rel (%p12) target = $region8
    $region5: #{tpu_custom_call.1} parent=1 // loop_body
      %s16 = ssub.s32 %s11, 1
      %s17 = ssub.s32 %s11, 2
      %s27 = sadd.s32 1, %s20
      %p28 = scmp.ge.s32.totalorder %s27, 1
      %s29 = scalar_select %p28, 0, %s27
      %s30 = sadd.s32 1, %s19
      %s31 = scalar_select %p28, %s30, %s19
      %p32 = scmp.ge.s32.totalorder %s31, 1
      %s33 = scalar_select %p32, 0, %s31
      %s34 = sadd.s32 1, %s18
      %s35 = scalar_select %p32, %s34, %s18
      %p36 = scmp.ge.s32.totalorder %s35, 2
      %s37 = scalar_select %p36, 0, %s35
      %s38 = ssub.s32 %s18, %s37
      %s39 = ssub.s32 %s20, %s29
      %s40 = sor.u32 %s38, %s39
      %p41 = scmp.eq.s32.totalorder %s40, 0
      %s43 = sadd.s32 %s42, 1
      %s44 = scalar_select %p41, %s42, %s43
      %p47 = pneg %p41
      %p48 = scmp.eq.s32.totalorder %s11, 1
      %p49 = por %p47, %p48
      %p50 = scmp.ne.s32.totalorder %s42, %s45
      %p51 = scmp.eq.s32.totalorder %s11, 0
      %p52 = por %p50, %p51
      %p53 = scmp.ne.s32.totalorder %s42, %s45
      %p54 = scmp.eq.s32.totalorder %s16, 1
      %p55 = por %p53, %p54
      %p56 = scmp.ne.s32.totalorder %s45, %s46
      %p57 = scmp.eq.s32.totalorder %s16, 0
      %p58 = por %p56, %p57
      %p59 = scmp.ne.s32.totalorder %s45, %s46
      %p60 = scmp.eq.s32.totalorder %s17, 1
      %p61 = por %p59, %p60
      %p63 = scmp.ne.s32.totalorder %s46, %s62
      %p64 = scmp.eq.s32.totalorder %s17, 0
      %p65 = por %p63, %p64
      %s66 = ssub.s32 %s20, %s29
      %s67 = ssub.s32 %s19, %s33
      %s68 = sor.u32 %s66, %s67
      %p69 = scmp.eq.s32.totalorder %s68, 0
      %s71 = sadd.s32 %s70, 1
      %s72 = scalar_select %p69, %s70, %s71
      %p75 = pneg %p69
      %p76 = scmp.eq.s32.totalorder %s11, 1
      %p77 = por %p75, %p76
      %p78 = scmp.ne.s32.totalorder %s70, %s73
      %p79 = scmp.eq.s32.totalorder %s11, 0
      %p80 = por %p78, %p79
      %p81 = scmp.ne.s32.totalorder %s70, %s73
      %p82 = scmp.eq.s32.totalorder %s16, 1
      %p83 = por %p81, %p82
      %p84 = scmp.ne.s32.totalorder %s73, %s74
      %p85 = scmp.eq.s32.totalorder %s16, 0
      %p86 = por %p84, %p85
      %p87 = scmp.ne.s32.totalorder %s73, %s74
      %p88 = scmp.eq.s32.totalorder %s17, 1
      %p89 = por %p87, %p88
      %p91 = scmp.ne.s32.totalorder %s74, %s90
      %p92 = scmp.eq.s32.totalorder %s17, 0
      %p93 = por %p91, %p92
      %s94 = ssub.s32 %s18, %s37
      %s95 = ssub.s32 %s19, %s33
      %s96 = sor.u32 %s94, %s95
      %p97 = scmp.eq.s32.totalorder %s96, 0
      %s99 = sadd.s32 %s98, 1
      %s100 = scalar_select %p97, %s98, %s99
      %p103 = pneg %p97
      %p104 = scmp.eq.s32.totalorder %s11, 1
      %p105 = por %p103, %p104
      %p106 = scmp.ne.s32.totalorder %s98, %s101
      %p107 = scmp.eq.s32.totalorder %s11, 0
      %p108 = por %p106, %p107
      %p109 = scmp.ne.s32.totalorder %s98, %s101
      %p110 = scmp.eq.s32.totalorder %s16, 1
      %p111 = por %p109, %p110
      %p112 = scmp.ne.s32.totalorder %s101, %s102
      %p113 = scmp.eq.s32.totalorder %s16, 0
      %p114 = por %p112, %p113
      %p115 = scmp.ne.s32.totalorder %s101, %s102
      %p116 = scmp.eq.s32.totalorder %s17, 1
      %p117 = por %p115, %p116
      %p119 = scmp.ne.s32.totalorder %s102, %s118
      %p120 = scmp.eq.s32.totalorder %s17, 0
      %p121 = por %p119, %p120
      %p122 = scmp.le.s32.totalorder 1, %s11
      %p123 = scmp.lt.s32.totalorder %s11, 3
      %p124 = pnand %p122, %p123
      %p125 = pneg %p124
      // Predicated region
      $region9: #{tpu_custom_call.1} parent=5 // pred_check
        _
      $region10: #{tpu_custom_call.1} parent=5 // pred_check_branch
        %127 = sbr.rel (%p124) target = $region12
      $region11: #{tpu_custom_call.1} parent=5 // pred_region
        %s128 = ssub.s32 %s11, 1
        // Predicated region
        $region13: #{tpu_custom_call.1} parent=11 // pred_check
          %p129 = pneg %p86
        $region14: #{tpu_custom_call.1} parent=11 // pred_check_branch
          %131 = sbr.rel (%p129) target = $region16
        $region15: #{tpu_custom_call.1} parent=11 // pred_region
          %s132 = smul.u32 4, %s23
          %p133 = scmp.lt.s32.totalorder %s132, 3
          %s134 = scalar_select %p133, %s132, 3
          %p135 = scmp.lt.s32.totalorder %s22, 0
          %s136 = scalar_select %p135, %s22, 0
          %s137 = sadd.s32 %s136, %s134
          %s138 = smul.addr %s137, 8
          %s139 = scalar_lea.vmem %s1, %s138
          %s140 = smul.u32 4, %s23
        $region16: #{tpu_custom_call.1} parent=11 // pred_fallthru
          _
      $region12: #{tpu_custom_call.1} parent=5 // pred_fallthru
        _
      %p141 = scmp.lt.s32.totalorder %s11, 2
      // Predicated region
      $region17: #{tpu_custom_call.1} parent=5 // pred_check
        %p142 = pneg %p141
      $region18: #{tpu_custom_call.1} parent=5 // pred_check_branch
        %144 = sbr.rel (%p142) target = $region20
      $region19: #{tpu_custom_call.1} parent=5 // pred_region
        // Predicated region
        $region21: #{tpu_custom_call.1} parent=19 // pred_check
          %p145 = pneg %p52
        $region22: #{tpu_custom_call.1} parent=19 // pred_check_branch
          %147 = sbr.rel (%p145) target = $region24
        $region23: #{tpu_custom_call.1} parent=19 // pred_region
          %p148 = scmp.lt.s32.totalorder %s18, 1
          %s149 = scalar_select %p148, %s18, 1
          %p150 = scmp.lt.s32.totalorder %s20, 0
          %s151 = scalar_select %p150, %s20, 0
          %s152 = sadd.s32 %s151, %s149
          %s153 = smul.addr %s152, 8
          %s154 = scalar_lea.vmem %s0, %s153
        $region24: #{tpu_custom_call.1} parent=19 // pred_fallthru
          _
      $region20: #{tpu_custom_call.1} parent=5 // pred_fallthru
        _
      %p155 = scmp.le.s32.totalorder 1, %s11
      %p156 = scmp.lt.s32.totalorder %s11, 3
      %p157 = pnand %p155, %p156
      %p158 = pneg %p157
      // Predicated region
      $region25: #{tpu_custom_call.1} parent=5 // pred_check
        _
      $region26: #{tpu_custom_call.1} parent=5 // pred_check_branch
        %160 = sbr.rel (%p157) target = $region28
      $region27: #{tpu_custom_call.1} parent=5 // pred_region
        %s161 = ssub.s32 %s11, 1
        %p162 = scmp.lt.s32.totalorder %s21, 1
        %s163 = scalar_select %p162, %s21, 1
        %p164 = scmp.lt.s32.totalorder %s23, 0
        %s165 = scalar_select %p164, %s23, 0
        %s166 = sadd.s32 %s165, %s163
        %s167 = smul.addr %s166, 8
        %s168 = scalar_lea.vmem %s0, %s167
        %p169 = pneg %p58
        %p170 = pneg %p55
        %s171 = smul.u32 4, %s23
        %p172 = scmp.lt.s32.totalorder %s171, 3
        %s173 = scalar_select %p172, %s171, 3
        %p174 = scmp.lt.s32.totalorder %s22, 0
        %s175 = scalar_select %p174, %s22, 0
        %s176 = sadd.s32 %s175, %s173
        %s177 = smul.addr %s176, 8
        %s178 = scalar_lea.vmem %s1, %s177
        %p179 = pneg %p86
        %p180 = pneg %p83
        %p181 = pneg %p114
        %p182 = pneg %p111
        %s183 = sand.u32 %s101, 1
        %s184 = scalar_lea.sflag [#allocation4], %s183
        %s185 = sand.u32 %s101, 1
        %s186 = smul.addr %s185, 8
        %s187 = scalar_lea.vmem [#allocation3], %s186
        %p188 = scmp.lt.s32.totalorder %s21, 1
        %s189 = scalar_select %p188, %s21, 1
        %p190 = scmp.lt.s32.totalorder %s23, 0
        %s191 = scalar_select %p190, %s23, 0
        %s192 = sadd.s32 %s191, %s189
        %s193 = smul.addr %s192, 8
        %s194 = scalar_lea.vmem %s0, %s193
        %s195 = smul.u32 4, %s23
        %p196 = scmp.lt.s32.totalorder %s195, 3
        %s197 = scalar_select %p196, %s195, 3
        %p198 = scmp.lt.s32.totalorder %s22, 0
        %s199 = scalar_select %p198, %s22, 0
        %s200 = sadd.s32 %s199, %s197
        %s201 = smul.addr %s200, 8
        %s202 = scalar_lea.vmem %s1, %s201
        %s203 = smul.u32 4, %s23
        %p204 = scmp.eq.s32.totalorder %s23, 0
        // Predicated region
        $region29: #{tpu_custom_call.1} parent=27 // pred_check
          %p205 = pneg %p204
        $region30: #{tpu_custom_call.1} parent=27 // pred_check_branch
          %207 = sbr.rel (%p205) target = $region32
        $region31: #{tpu_custom_call.1} parent=27 // pred_region
          %208 = vst [vmem:[#allocation2] sm:$0xff] 0.0
        $region32: #{tpu_custom_call.1} parent=27 // pred_fallthru
          _
        %v209 = vld [vmem:[%s194] sm:$0xff]
        %v210 = vld [vmem:[#allocation2] sm:$0xff]
        %v211 = vld [vmem:[%s202] sm:$0xff]
        %v212 = vld [vmem:[%s202 + $0x8] sm:$0xff]
        %v213 = vld [vmem:[%s202 + $0x10] sm:$0xff]
        %v214 = vld [vmem:[%s202 + $0x18] sm:$0xff]
        %vm215 = vcmask 261120
        %v217 = vsel %vm215, %v209, 0
        %219 = vmatpush.msra.mxu0 0.0
        %220 = vmatpush.msra.mxu0 0.0
        %221 = vmatpush.msra.mxu0 0.0
        %222 = vmatpush.msra.mxu0 0.0
        %223 = vmatpush.msra.mxu0 0.0
        %224 = vmatpush.msra.mxu0 0.0
        %225 = vmatpush.msra.mxu0 0.0
        %226 = vmatpush.msra.mxu0 0.0
        %227 = vmatpush.msra.mxu0 0.0
        %228 = vmatpush.msra.mxu0 0.0
        %229 = vmatpush.msra.mxu0 0.0
        %230 = vmatpush.msra.mxu0 0.0
        %231 = vmatpush.msra.mxu0 %v214
        %232 = vmatpush.msra.mxu0 %v213
        %233 = vmatpush.msra.mxu0 %v212
        %234 = vmatpush.msra.mxu0 %v211
        %235 = vmatmul.f32.gmra.mxu0 %v217
        %v236 = vpop.f32.mrf.mxu0
        %v237 = vadd.f32 0.0, %v236
        %238 = vdwg.mxu0
        %v239 = vadd.f32 %v210, %v237
        %240 = vst [vmem:[#allocation2] sm:$0xff] %v239
        // Predicated region
        $region33: #{tpu_custom_call.1} parent=27 // pred_check
          %p241 = pneg %p204
        $region34: #{tpu_custom_call.1} parent=27 // pred_check_branch
          %243 = sbr.rel (%p241) target = $region36
        $region35: #{tpu_custom_call.1} parent=27 // pred_region
          %v244 = vld [vmem:[#allocation2] sm:$0xff]
          %245 = vst [vmem:[%s187] sm:$0xff] %v244
        $region36: #{tpu_custom_call.1} parent=27 // pred_fallthru
          _
        %s246 = sand.u32 %s101, 1
        %s247 = scalar_lea.sflag [#allocation4], %s246
        %s248 = sand.u32 %s101, 1
        %s249 = smul.addr %s248, 8
        %s250 = scalar_lea.vmem [#allocation3], %s249
        // Predicated region
        $region37: #{tpu_custom_call.1} parent=27 // pred_check
          %p251 = pneg %p111
        $region38: #{tpu_custom_call.1} parent=27 // pred_check_branch
          %253 = sbr.rel (%p251) target = $region40
        $region39: #{tpu_custom_call.1} parent=27 // pred_region
          %255 = vsyncadd %s247, 0
          %s256 = sadd.s32 %s22, %s21
          %s257 = smul.addr %s256, 8
          %s258 = scalar_lea.hbm %s2, %s257
          %s260 = sshll.u32 %s250, 4
          %s261 = int_to_ptr.vmem [resolvable:$true] %s260
          %s262 = sshll.u32 %s258, 4
          %s263 = int_to_ptr.hbm [resolvable:$true] %s262
          %265 = dma.vmem_to_hbm [thread:$0]  %s261, 128, %s263, %s247
        $region40: #{tpu_custom_call.1} parent=27 // pred_fallthru
          _
      $region28: #{tpu_custom_call.1} parent=5 // pred_fallthru
        _
      %p266 = scmp.le.s32.totalorder 2, %s11
      // Predicated region
      $region41: #{tpu_custom_call.1} parent=5 // pred_check
        %p267 = pneg %p266
      $region42: #{tpu_custom_call.1} parent=5 // pred_check_branch
        %269 = sbr.rel (%p267) target = $region44
      $region43: #{tpu_custom_call.1} parent=5 // pred_region
        %s270 = ssub.s32 %s11, 2
        // Predicated region
        $region45: #{tpu_custom_call.1} parent=43 // pred_check
          %p271 = pneg %p117
        $region46: #{tpu_custom_call.1} parent=43 // pred_check_branch
          %273 = sbr.rel (%p271) target = $region48
        $region47: #{tpu_custom_call.1} parent=43 // pred_region
          %s274 = sand.u32 %s102, 1
          %s275 = scalar_lea.sflag [#allocation4], %s274
          %s276 = sand.u32 %s102, 1
          %s277 = smul.addr %s276, 8
          %s278 = scalar_lea.vmem [#allocation3], %s277
          %280 = dma.done %s275, 128
        $region48: #{tpu_custom_call.1} parent=43 // pred_fallthru
          _
      $region44: #{tpu_custom_call.1} parent=5 // pred_fallthru
        _
    $region6: #{tpu_custom_call.1} parent=1 // loop_footer
      %s15 = sadd.s32 1, %s11
    $region7: #{tpu_custom_call.1} parent=1 // loop_footer_branch
      %10 = sbr.rel target = $region3
    $region8: #{tpu_custom_call.1} parent=1 // loop_exit
      _
    %281 = vsyncpa [#allocation4], 1
    %s282 = scalar_lea.sflag [#allocation4], 1
    %283 = vsyncpa %s282, 1

</llo_original>
